<compile_context>
chip_gen: v7x
topology: tpu7x:2x2x1
jax: 0.10.0
libtpu: 0.0.40
codegen_flags: <defaults>
</compile_context>

<pallas_src>
import jax
import jax.numpy as jnp
from jax import lax
from jax.experimental import pallas as pl
from jax.experimental.pallas import tpu as pltpu


def _router_kernel(x_ref, w_ref, b_ref, wt_ref, idx_ref):
    # x_ref:  (tm, d_model)          token tile (compute dtype: f32 or bf16)
    # w_ref:  (n_experts, d_model)   classifier weight (torch Linear layout), resident
    # b_ref:  (n_experts, 1)         classifier bias, resident
    # wt_ref: (1, 1, tm) float32     max softmax probability per token (lane-dense)
    # idx_ref:(1, 1, tm) int32       argmax expert index per token (lane-dense)
    n_experts = w_ref.shape[0]

    # logits^T: (n_experts, tm). Contraction over d_model == A @ B^T on the MXU;
    # f32 accumulation regardless of the input dtype.
    logits = lax.dot_general(
        w_ref[...], x_ref[...],
        dimension_numbers=(((1,), (1,)), ((), ())),
        preferred_element_type=jnp.float32,
    ) + b_ref[...].astype(jnp.float32)                             # (E, tm)

    # Softmax over experts (sublane axis); max prob == 1 / sum(exp(l - m)).
    m = jnp.max(logits, axis=0, keepdims=True)                     # (1, tm)
    denom = jnp.sum(jnp.exp(logits - m), axis=0, keepdims=True)    # (1, tm)
    # approx=False: the EUP approximate reciprocal's error exceeds 1e-5.
    wt_ref[0] = pl.reciprocal(denom, approx=False)                 # == max softmax prob

    # argmax(softmax) == argmax(logits); first-max tie-break (matches jnp.argmax).
    e_ids = lax.broadcasted_iota(jnp.int32, logits.shape, 0)       # expert id per row
    idx = jnp.min(jnp.where(logits == m, e_ids, n_experts), axis=0, keepdims=True)
    idx_ref[0] = idx.astype(jnp.int32)                             # (1, tm)
    # NOTE: for very large n_experts (E*tm f32 >> the 256 KiB vreg file) the
    # passes over `logits` above should be fused per 128-256 lane slab with an
    # unrolled fori_loop; at small/medium E they hide under the x DMA.


def _hw_info():
    """Returns (physical VMEM bytes per core, is_megacore)."""
    vmem = 64 * 1024 * 1024           # conservative default == v7x per-TC VMEM
    megacore = False
    try:
        vmem = int(pltpu.get_tpu_info().vmem_capacity_bytes)
    except Exception:
        pass
    try:
        kind = jax.devices()[0].device_kind.lower()
        megacore = ("v7" in kind) or ("tpu7" in kind)
    except Exception:
        pass
    return vmem, megacore


def top1_router(x, w, b, *, compute_dtype=None, tm=None, vmem_limit_bytes=None):
    """x: (batch, n_ctx, d_model); w: (n_experts, d_model) (torch Linear layout);
    b: (n_experts,).  Returns (weights, top1_experts), each (batch, n_ctx) with
    weights in float32 and experts in int32.

    compute_dtype: optional narrower dtype (e.g. jnp.bfloat16) for the x / w
    fed to the kernel; matmul accumulation and softmax stay in float32."""
    batch, n_ctx, d_model = x.shape
    n_experts = w.shape[0]
    n_tokens = batch * n_ctx

    cdt = jax.dtypes.canonicalize_dtype(
        x.dtype if compute_dtype is None else compute_dtype)
    itemsize = cdt.itemsize
    row_bytes = d_model * itemsize

    vmem_phys, megacore = _hw_info()
    usable = (vmem_phys * 3) // 4          # headroom for Mosaic internal scratch

    # Resident weight + bias bytes.  Budget assumes 2 pipeline buffers even if
    # the single-buffer hint below is honored (conservative).
    wb_bytes = 2 * (n_experts * d_model * itemsize + n_experts * 4)

    # ---- Token-tile selection: largest tile that fits the VMEM budget --------
    if tm is None:
        tm_cap = 2048 if d_model <= 512 else 512   # amortize per-step overhead
    else:
        tm_cap = int(tm)
    out_bytes_per_row = 2 * 2 * 4                  # 2 outputs x 2 buffers x 4 B
    x_budget = usable - wb_bytes - (1 << 20)
    per_row = 2 * row_bytes + out_bytes_per_row    # x is double-buffered
    tm_fit = max(8, x_budget // per_row) if x_budget > 0 else 8
    tm_sel = int(max(8, min(tm_cap, tm_fit, n_tokens)))
    if tm_sel >= n_tokens:
        tm_sel = n_tokens                          # full dim: any size is legal
    elif tm_sel >= 128:
        tm_sel = (tm_sel // 128) * 128             # lane-dense output stores
    else:
        tm_sel = (tm_sel // 8) * 8                 # sublane tiling of the x tile
    # Megacore (v7x) only: keep >= 2 grid steps so both TensorCores get work
    # under dimension_semantics=("parallel",).  Single-TC parts skip this.
    if megacore and n_tokens > 8 and pl.cdiv(n_tokens, tm_sel) < 2:
        tm_sel = max(8, (((n_tokens + 1) // 2) + 7) // 8 * 8)
    n_blocks = pl.cdiv(n_tokens, tm_sel)

    if vmem_limit_bytes is None:
        need = (2 * tm_sel * row_bytes            # x double buffer
                + wb_bytes                         # resident weights / bias
                + tm_sel * out_bytes_per_row       # outputs
                + (2 << 20))                       # slack
        vmem_limit_bytes = int(min(max(need, 4 << 20), usable))

    # ---- Inputs: flatten tokens, optional bf16 cast, NO padding copy ---------
    # A ragged last tile is handled by Pallas boundary handling; the garbage
    # lanes are per-token independent and sliced off below.
    x2 = x.reshape(n_tokens, d_model)
    if x2.dtype != cdt:
        x2 = x2.astype(cdt)
    w2 = w if w.dtype == cdt else w.astype(cdt)
    b2 = b.reshape(n_experts, 1)

    def build(single_buffer_weights):
        resident_kwargs = (
            dict(pipeline_mode=pl.Buffered(1)) if single_buffer_weights else {}
        )
        grid_spec = pltpu.PrefetchScalarGridSpec(
            num_scalar_prefetch=0,
            grid=(n_blocks,),
            in_specs=[
                pl.BlockSpec((tm_sel, d_model), lambda i: (i, 0)),
                pl.BlockSpec((n_experts, d_model), lambda i: (0, 0),
                             **resident_kwargs),
                pl.BlockSpec((n_experts, 1), lambda i: (0, 0),
                             **resident_kwargs),
            ],
            out_specs=[
                pl.BlockSpec((1, 1, tm_sel), lambda i: (i, 0, 0)),
                pl.BlockSpec((1, 1, tm_sel), lambda i: (i, 0, 0)),
            ],
        )
        return pl.pallas_call(
            _router_kernel,
            out_shape=(
                jax.ShapeDtypeStruct((n_blocks, 1, tm_sel), jnp.float32),
                jax.ShapeDtypeStruct((n_blocks, 1, tm_sel), jnp.int32),
            ),
            grid_spec=grid_spec,
            compiler_params=pltpu.CompilerParams(
                dimension_semantics=("parallel",),
                vmem_limit_bytes=vmem_limit_bytes,
            ),
        )

    try:
        wt, idx = build(single_buffer_weights=True)(x2, w2, b2)
    except Exception:
        # The single-buffer pipeline hint is a pure VMEM optimization; fall back
        # to default double-buffering if this JAX version rejects Buffered(1).
        wt, idx = build(single_buffer_weights=False)(x2, w2, b2)

    weights = wt.reshape(n_blocks * tm_sel)[:n_tokens].reshape(batch, n_ctx)
    top1_experts = idx.reshape(n_blocks * tm_sel)[:n_tokens].reshape(batch, n_ctx)
    return weights, top1_experts


def _reference(x, w, b):
    logits = jnp.einsum("btd,ed->bte", x, w) + b
    probs = jax.nn.softmax(logits, axis=-1)
    return jnp.max(probs, axis=-1), jnp.argmax(probs, axis=-1)


if __name__ == "__main__":
    # Config: batch_size=2, n_ctx=8, d_model=32, n_experts=8, k=1
    batch_size, n_ctx, d_model, n_experts = 2, 8, 32, 8

    key = jax.random.PRNGKey(0)
    kx, kw, kb = jax.random.split(key, 3)

    x = jax.random.normal(kx, (batch_size, n_ctx, d_model), dtype=jnp.float32)
    # torch.nn.Linear weight layout: (n_experts, d_model)
    bound = 1.0 / jnp.sqrt(d_model)
    w = (jax.random.uniform(kw, (n_experts, d_model), dtype=jnp.float32) - 0.5) * 2.0 * bound
    b = (jax.random.uniform(kb, (n_experts,), dtype=jnp.float32) - 0.5) * 2.0 * bound

    # --- f32 compute path (tight tolerance vs the XLA reference) -------------
    weights, top1_experts = top1_router(x, w, b)
    jax.block_until_ready((weights, top1_experts))

    ref_w, ref_i = _reference(x, w, b)
    assert weights.shape == (batch_size, n_ctx)
    assert top1_experts.shape == (batch_size, n_ctx)
    assert jnp.allclose(weights, ref_w, atol=1e-5, rtol=1e-5)
    assert jnp.array_equal(top1_experts, ref_i.astype(jnp.int32))

    # --- bf16 compute path (halves HBM bytes; f32 accumulation in-kernel) ----
    w_bf, i_bf = top1_router(x, w, b, compute_dtype=jnp.bfloat16)
    jax.block_until_ready((w_bf, i_bf))

    xb = x.astype(jnp.bfloat16).astype(jnp.float32)
    wb = w.astype(jnp.bfloat16).astype(jnp.float32)
    ref_wb, ref_ib = _reference(xb, wb, b)
    assert jnp.allclose(w_bf, ref_wb, atol=2e-2, rtol=2e-2)
    assert jnp.array_equal(i_bf, ref_ib.astype(jnp.int32))

    print("KERNEL_OK")
</pallas_src>

<mosaic_0001>
module attributes {stable_mosaic.version = 11 : i64} {
  func.func @_router_kernel(%arg0: i32, %arg1: memref<16x32xf32, #tpu.memory_space<vmem>>, %arg2: memref<8x32xf32, #tpu.memory_space<vmem>>, %arg3: memref<8x1xf32, #tpu.memory_space<vmem>>, %arg4: memref<1x1x16xf32, #tpu.memory_space<vmem>>, %arg5: memref<1x1x16xi32, #tpu.memory_space<vmem>>) attributes {dimension_semantics = [#tpu.dimension_semantics<parallel>], iteration_bounds = array<i64: 1>, scalar_prefetch = 0 : i64, scratch_operands = 0 : i64, tpu.core_type = #tpu.core_type<tc>, window_params = [{transform_indices = @transform_0, window_bounds = array<i64: 16, 32>}, {pipeline_mode = #tpu.pipeline_mode<synchronous>, transform_indices = @transform_1, window_bounds = array<i64: 8, 32>}, {pipeline_mode = #tpu.pipeline_mode<synchronous>, transform_indices = @transform_2, window_bounds = array<i64: 8, 1>}, {transform_indices = @transform_3, window_bounds = array<i64: 1, 1, 16>}, {transform_indices = @transform_4, window_bounds = array<i64: 1, 1, 16>}]} {
    %c0 = arith.constant 0 : index
    %c0_0 = arith.constant 0 : index
    %0 = vector.load %arg2[%c0, %c0_0] : memref<8x32xf32, #tpu.memory_space<vmem>>, vector<8x32xf32>
    %c0_1 = arith.constant 0 : index
    %c0_2 = arith.constant 0 : index
    %1 = vector.load %arg1[%c0_1, %c0_2] : memref<16x32xf32, #tpu.memory_space<vmem>>, vector<16x32xf32>
    %cst = arith.constant dense<0.000000e+00> : vector<8x16xf32>
    %2 = tpu.matmul %0, %1, %cst {dimension_numbers = #tpu.dot_dimension_numbers<[1], [1], [0], [0], [0, 0, 1, 0], [], []>} : vector<8x32xf32>, vector<16x32xf32>, vector<8x16xf32> -> vector<8x16xf32>
    %c0_3 = arith.constant 0 : index
    %c0_4 = arith.constant 0 : index
    %3 = vector.load %arg3[%c0_3, %c0_4] : memref<8x1xf32, #tpu.memory_space<vmem>>, vector<8x1xf32>
    %4 = vector.broadcast %3 : vector<8x1xf32> to vector<8x16xf32>
    %5 = arith.addf %2, %4 : vector<8x16xf32>
    %cst_5 = arith.constant dense<0xFF800000> : vector<16xf32>
    %6 = vector.multi_reduction <maximumf>, %5, %cst_5 [0] : vector<8x16xf32> to vector<16xf32>
    %7 = vector.shape_cast %6 : vector<16xf32> to vector<1x16xf32>
    %8 = vector.broadcast %7 : vector<1x16xf32> to vector<8x16xf32>
    %9 = arith.subf %5, %8 : vector<8x16xf32>
    %10 = math.exp %9 : vector<8x16xf32>
    %cst_6 = arith.constant dense<0.000000e+00> : vector<16xf32>
    %11 = vector.multi_reduction <add>, %10, %cst_6 [0] : vector<8x16xf32> to vector<16xf32>
    %12 = vector.shape_cast %11 : vector<16xf32> to vector<1x16xf32>
    %13 = tpu.reciprocal %12 : vector<1x16xf32> -> vector<1x16xf32>
    %c0_7 = arith.constant 0 : index
    %c0_8 = arith.constant 0 : index
    %c0_9 = arith.constant 0 : index
    %14 = vector.load %arg4[%c0_7, %c0_8, %c0_9] : memref<1x1x16xf32, #tpu.memory_space<vmem>>, vector<1x1x16xf32>
    %15 = vector.shape_cast %14 : vector<1x1x16xf32> to vector<1x16xf32>
    %16 = vector.shape_cast %13 : vector<1x16xf32> to vector<1x1x16xf32>
    tpu.vector_store %arg4[%c0_7, %c0_8, %c0_9], %16 {strides = array<i32>} : memref<1x1x16xf32, #tpu.memory_space<vmem>>, vector<1x1x16xf32>,
    %17 = tpu.iota {dimensions = array<i32: 0>} : vector<8x16xi32>
    %18 = vector.broadcast %7 : vector<1x16xf32> to vector<8x16xf32>
    %19 = arith.cmpf oeq, %5, %18 : vector<8x16xf32>
    %c8_i32 = arith.constant 8 : i32
    %20 = vector.broadcast %c8_i32 : i32 to vector<8x16xi32>
    %21 = arith.select %19, %17, %20 : vector<8x16xi1>, vector<8x16xi32>
    %cst_10 = arith.constant dense<2147483647> : vector<16xi32>
    %22 = vector.multi_reduction <minsi>, %21, %cst_10 [0] : vector<8x16xi32> to vector<16xi32>
    %23 = vector.shape_cast %22 : vector<16xi32> to vector<1x16xi32>
    %c0_11 = arith.constant 0 : index
    %c0_12 = arith.constant 0 : index
    %c0_13 = arith.constant 0 : index
    %24 = vector.load %arg5[%c0_11, %c0_12, %c0_13] : memref<1x1x16xi32, #tpu.memory_space<vmem>>, vector<1x1x16xi32>
    %25 = vector.shape_cast %24 : vector<1x1x16xi32> to vector<1x16xi32>
    %26 = vector.shape_cast %23 : vector<1x16xi32> to vector<1x1x16xi32>
    tpu.vector_store %arg5[%c0_11, %c0_12, %c0_13], %26 {strides = array<i32>} : memref<1x1x16xi32, #tpu.memory_space<vmem>>, vector<1x1x16xi32>,
    return
  }
  func.func @transform_0(%arg0: i32) -> (i32, i32) {
    %c0_i32 = arith.constant 0 : i32
    %c0_i32_0 = arith.constant 0 : i32
    return %arg0, %c0_i32 : i32, i32
  }
  func.func @transform_1(%arg0: i32) -> (i32, i32) {
    %c0_i32 = arith.constant 0 : i32
    %c0_i32_0 = arith.constant 0 : i32
    %c0_i32_1 = arith.constant 0 : i32
    return %c0_i32, %c0_i32_0 : i32, i32
  }
  func.func @transform_2(%arg0: i32) -> (i32, i32) {
    %c0_i32 = arith.constant 0 : i32
    %c0_i32_0 = arith.constant 0 : i32
    %c0_i32_1 = arith.constant 0 : i32
    return %c0_i32, %c0_i32_0 : i32, i32
  }
  func.func @transform_3(%arg0: i32) -> (i32, i32, i32) {
    %c0_i32 = arith.constant 0 : i32
    %c0_i32_0 = arith.constant 0 : i32
    %c0_i32_1 = arith.constant 0 : i32
    return %arg0, %c0_i32, %c0_i32_0 : i32, i32, i32
  }
  func.func @transform_4(%arg0: i32) -> (i32, i32, i32) {
    %c0_i32 = arith.constant 0 : i32
    %c0_i32_0 = arith.constant 0 : i32
    %c0_i32_1 = arith.constant 0 : i32
    return %arg0, %c0_i32, %c0_i32_0 : i32, i32, i32
  }
}

module attributes {stable_mosaic.version = 11 : i64} {
  func.func @_router_kernel(%arg0: i32, %arg1: memref<16x32xf32, #tpu.memory_space<vmem>>, %arg2: memref<8x32xf32, #tpu.memory_space<vmem>>, %arg3: memref<8x1xf32, #tpu.memory_space<vmem>>, %arg4: memref<1x1x16xf32, #tpu.memory_space<vmem>>, %arg5: memref<1x1x16xi32, #tpu.memory_space<vmem>>) attributes {dimension_semantics = [#tpu.dimension_semantics<parallel>], iteration_bounds = array<i64: 1>, scalar_prefetch = 0 : i64, scratch_operands = 0 : i64, tpu.core_type = #tpu.core_type<tc>, window_params = [{transform_indices = @transform_0, window_bounds = array<i64: 16, 32>}, {pipeline_mode = #tpu.pipeline_mode<synchronous>, transform_indices = @transform_1, window_bounds = array<i64: 8, 32>}, {pipeline_mode = #tpu.pipeline_mode<synchronous>, transform_indices = @transform_2, window_bounds = array<i64: 8, 1>}, {transform_indices = @transform_3, window_bounds = array<i64: 1, 1, 16>}, {transform_indices = @transform_4, window_bounds = array<i64: 1, 1, 16>}]} {
    %c0 = arith.constant 0 : index
    %c0_0 = arith.constant 0 : index
    %0 = vector.load %arg2[%c0, %c0_0] : memref<8x32xf32, #tpu.memory_space<vmem>>, vector<8x32xf32>
    %c0_1 = arith.constant 0 : index
    %c0_2 = arith.constant 0 : index
    %1 = vector.load %arg1[%c0_1, %c0_2] : memref<16x32xf32, #tpu.memory_space<vmem>>, vector<16x32xf32>
    %cst = arith.constant dense<0.000000e+00> : vector<8x16xf32>
    %2 = tpu.matmul %0, %1, %cst {dimension_numbers = #tpu.dot_dimension_numbers<[1], [1], [0], [0], [0, 0, 1, 0], [], []>} : vector<8x32xf32>, vector<16x32xf32>, vector<8x16xf32> -> vector<8x16xf32>
    %c0_3 = arith.constant 0 : index
    %c0_4 = arith.constant 0 : index
    %3 = vector.load %arg3[%c0_3, %c0_4] : memref<8x1xf32, #tpu.memory_space<vmem>>, vector<8x1xf32>
    %4 = vector.broadcast %3 : vector<8x1xf32> to vector<8x16xf32>
    %5 = arith.addf %2, %4 : vector<8x16xf32>
    %cst_5 = arith.constant dense<0xFF800000> : vector<16xf32>
    %6 = vector.multi_reduction <maximumf>, %5, %cst_5 [0] : vector<8x16xf32> to vector<16xf32>
    %7 = vector.shape_cast %6 : vector<16xf32> to vector<1x16xf32>
    %8 = vector.broadcast %7 : vector<1x16xf32> to vector<8x16xf32>
    %9 = arith.subf %5, %8 : vector<8x16xf32>
    %10 = math.exp %9 : vector<8x16xf32>
    %cst_6 = arith.constant dense<0.000000e+00> : vector<16xf32>
    %11 = vector.multi_reduction <add>, %10, %cst_6 [0] : vector<8x16xf32> to vector<16xf32>
    %12 = vector.shape_cast %11 : vector<16xf32> to vector<1x16xf32>
    %13 = tpu.reciprocal %12 : vector<1x16xf32> -> vector<1x16xf32>
    %c0_7 = arith.constant 0 : index
    %c0_8 = arith.constant 0 : index
    %c0_9 = arith.constant 0 : index
    %14 = vector.load %arg4[%c0_7, %c0_8, %c0_9] : memref<1x1x16xf32, #tpu.memory_space<vmem>>, vector<1x1x16xf32>
    %15 = vector.shape_cast %14 : vector<1x1x16xf32> to vector<1x16xf32>
    %16 = vector.shape_cast %13 : vector<1x16xf32> to vector<1x1x16xf32>
    tpu.vector_store %arg4[%c0_7, %c0_8, %c0_9], %16 {strides = array<i32>} : memref<1x1x16xf32, #tpu.memory_space<vmem>>, vector<1x1x16xf32>,
    %17 = tpu.iota {dimensions = array<i32: 0>} : vector<8x16xi32>
    %18 = vector.broadcast %7 : vector<1x16xf32> to vector<8x16xf32>
    %19 = arith.cmpf oeq, %5, %18 : vector<8x16xf32>
    %c8_i32 = arith.constant 8 : i32
    %20 = vector.broadcast %c8_i32 : i32 to vector<8x16xi32>
    %21 = arith.select %19, %17, %20 : vector<8x16xi1>, vector<8x16xi32>
    %cst_10 = arith.constant dense<2147483647> : vector<16xi32>
    %22 = vector.multi_reduction <minsi>, %21, %cst_10 [0] : vector<8x16xi32> to vector<16xi32>
    %23 = vector.shape_cast %22 : vector<16xi32> to vector<1x16xi32>
    %c0_11 = arith.constant 0 : index
    %c0_12 = arith.constant 0 : index
    %c0_13 = arith.constant 0 : index
    %24 = vector.load %arg5[%c0_11, %c0_12, %c0_13] : memref<1x1x16xi32, #tpu.memory_space<vmem>>, vector<1x1x16xi32>
    %25 = vector.shape_cast %24 : vector<1x1x16xi32> to vector<1x16xi32>
    %26 = vector.shape_cast %23 : vector<1x16xi32> to vector<1x1x16xi32>
    tpu.vector_store %arg5[%c0_11, %c0_12, %c0_13], %26 {strides = array<i32>} : memref<1x1x16xi32, #tpu.memory_space<vmem>>, vector<1x1x16xi32>,
    return
  }
  func.func @transform_0(%arg0: i32) -> (i32, i32) {
    %c0_i32 = arith.constant 0 : i32
    %c0_i32_0 = arith.constant 0 : i32
    return %arg0, %c0_i32 : i32, i32
  }
  func.func @transform_1(%arg0: i32) -> (i32, i32) {
    %c0_i32 = arith.constant 0 : i32
    %c0_i32_0 = arith.constant 0 : i32
    %c0_i32_1 = arith.constant 0 : i32
    return %c0_i32, %c0_i32_0 : i32, i32
  }
  func.func @transform_2(%arg0: i32) -> (i32, i32) {
    %c0_i32 = arith.constant 0 : i32
    %c0_i32_0 = arith.constant 0 : i32
    %c0_i32_1 = arith.constant 0 : i32
    return %c0_i32, %c0_i32_0 : i32, i32
  }
  func.func @transform_3(%arg0: i32) -> (i32, i32, i32) {
    %c0_i32 = arith.constant 0 : i32
    %c0_i32_0 = arith.constant 0 : i32
    %c0_i32_1 = arith.constant 0 : i32
    return %arg0, %c0_i32, %c0_i32_0 : i32, i32, i32
  }
  func.func @transform_4(%arg0: i32) -> (i32, i32, i32) {
    %c0_i32 = arith.constant 0 : i32
    %c0_i32_0 = arith.constant 0 : i32
    %c0_i32_1 = arith.constant 0 : i32
    return %arg0, %c0_i32, %c0_i32_0 : i32, i32, i32
  }
}

</mosaic_0001>

<llo_original>
// kernel: tpu_custom_call.1
$region0: #{tpu_custom_call.1}
  #allocation0 [shape = 'u32[]', space=smem, size = 0x4, offset = 0x4, fixed_abs, tag = 'smem constant byte address 0x4 - core index']
  #allocation1 [shape = 'u32[144,128]{1,0:T(1,128)}', space=vmem, size = 0x12000, scoped, tag = 'internal scratch']
  %s0 = inlined_call_operand.hbm [shape: f32[16,32], index: 0, kind: input, shape index: {}]
  %s1 = inlined_call_operand.vmem [shape: f32[8,32], index: 1, kind: input, shape index: {}]
  %s2 = inlined_call_operand.vmem [shape: f32[8,1], index: 2, kind: input, shape index: {}]
  %s3 = inlined_call_operand.hbm [shape: f32[1,1,16], index: 3, kind: output, shape index: {0}]
  %s4 = inlined_call_operand.hbm [shape: s32[1,1,16], index: 4, kind: output, shape index: {1}]
  %5 = xla_tuple %s3, %s4
  %s6 = sld [smem:[#allocation0]]
  $region34: #{tpu_custom_call.1} parent=0
    _
  %s8 = ssub.s32 1, %s6
  %s9 = scalar_select 0, %s8, %s6
  $region1: #{tpu_custom_call.1} parent=0
    #allocation2 [shape = 'u8[8192]{0}', space=vmem, size = 0x2000, scoped, tag = 'input window, operand 0, single buffered']
    #allocation3 [shape = 's32[1]{0}', space=sflag, size = 0x4, scoped, tag = 'scoped memory for tpu_custom_call.1']
    #allocation4 [shape = 's32[1]{0}', space=sflag, size = 0x4, scoped, tag = 'scoped memory for tpu_custom_call.1']
    #allocation5 [shape = 'u8[512]{0}', space=vmem, size = 0x400, scoped, tag = 'output window, operand 0, single buffered']
    #allocation6 [shape = 'u8[512]{0}', space=vmem, size = 0x400, scoped, tag = 'output window, operand 1, single buffered']
    #allocation7 [shape = 's32[1]{0}', space=sflag, size = 0x4, scoped, tag = 'scoped memory for tpu_custom_call.1']
    %10 = vsyncpa [#allocation3], 0
    %11 = vsyncpa [#allocation4], 0
    %12 = vsyncpa [#allocation7], 0
    // Predicated region
    $region2: #{tpu_custom_call.1} parent=1 // pred_check
      _
    $region3: #{tpu_custom_call.1} parent=1 // pred_check_branch
      %14 = sbr.rel (0) target = $region5
    $region4: #{tpu_custom_call.1} parent=1 // pred_region
      %s16 = ssub.s32 256, 256
      %17 = vsyncadd [#allocation3], %s16
      %s18 = sshll.u32 [#allocation2], 4
      %s19 = int_to_ptr.vmem [resolvable:$true] %s18
      %24 = dma.hbm_to_vmem [thread:$0]  %s0, 256, %s19, [#allocation3], 128, 128, 8
    $region5: #{tpu_custom_call.1} parent=1 // pred_fallthru
      _
    // Predicated region
    $region6: #{tpu_custom_call.1} parent=1 // pred_check
      _
    $region7: #{tpu_custom_call.1} parent=1 // pred_check_branch
      %26 = sbr.rel (0) target = $region9
    $region8: #{tpu_custom_call.1} parent=1 // pred_region
      _
    $region9: #{tpu_custom_call.1} parent=1 // pred_fallthru
      _
    // Predicated region
    $region10: #{tpu_custom_call.1} parent=1 // pred_check
      _
    $region11: #{tpu_custom_call.1} parent=1 // pred_check_branch
      %28 = sbr.rel (0) target = $region13
    $region12: #{tpu_custom_call.1} parent=1 // pred_region
      _
    $region13: #{tpu_custom_call.1} parent=1 // pred_fallthru
      _
    // Predicated region
    $region14: #{tpu_custom_call.1} parent=1 // pred_check
      _
    $region15: #{tpu_custom_call.1} parent=1 // pred_check_branch
      %30 = sbr.rel (0) target = $region17
    $region16: #{tpu_custom_call.1} parent=1 // pred_region
      %31 = dma.done [#allocation3], 256
    $region17: #{tpu_custom_call.1} parent=1 // pred_fallthru
      _
    %v32 = vld [vmem:[%s1] sm:$0xff]
    %v33 = vld [vmem:[#allocation2] sm:$0xff]
    %v34 = vld [vmem:[#allocation2 + $0x8] sm:$0xff]
    %v35 = vld [vmem:[%s2] sm:$0xff]
    %37 = vset.pattern.permute.xlu0 0
    %38 = vperm.xlu0 %37, %v35
    %v39 = vpop.permute.xlu0 %38
    %vm41 = vcmask 261120
    %v43 = vsel %vm41, %v32, 0
    %v46 = vsel %vm41, %v33, 0
    %v49 = vsel %vm41, %v34, 0
    %51 = vmatprep.subr.mxu0 0.0
    %52 = vmatpush1.xpose.msra.mxu0 %v46
    %53 = vmatprep.subr.mxu0 0.0
    %54 = vmatpush1.xpose.msra.mxu0 %v49
    %55 = vmatprep.subr.mxu0 0.0
    %56 = vmatpush1.xpose.msra.mxu0 0.0
    %57 = vmatprep.subr.mxu0 0.0
    %58 = vmatpush1.xpose.msra.mxu0 0.0
    %59 = vmatprep.subr.mxu0 0.0
    %60 = vmatpush1.xpose.msra.mxu0 0.0
    %61 = vmatprep.subr.mxu0 0.0
    %62 = vmatpush1.xpose.msra.mxu0 0.0
    %63 = vmatprep.subr.mxu0 0.0
    %64 = vmatpush1.xpose.msra.mxu0 0.0
    %65 = vmatprep.subr.mxu0 0.0
    %66 = vmatpush1.xpose.msra.mxu0 0.0
    %67 = vmatprep.subr.mxu0 0.0
    %68 = vmatpush1.xpose.msra.mxu0 0.0
    %69 = vmatprep.subr.mxu0 0.0
    %70 = vmatpush1.xpose.msra.mxu0 0.0
    %71 = vmatprep.subr.mxu0 0.0
    %72 = vmatpush1.xpose.msra.mxu0 0.0
    %73 = vmatprep.subr.mxu0 0.0
    %74 = vmatpush1.xpose.msra.mxu0 0.0
    %75 = vmatprep.subr.mxu0 0.0
    %76 = vmatpush1.xpose.msra.mxu0 0.0
    %77 = vmatprep.subr.mxu0 0.0
    %78 = vmatpush1.xpose.msra.mxu0 0.0
    %79 = vmatprep.subr.mxu0 0.0
    %80 = vmatpush1.xpose.msra.mxu0 0.0
    %81 = vmatprep.subr.mxu0 0.0
    %82 = vmatpush1.xpose.msra.mxu0 0.0
    %83 = vmatprep.subr.mxu0 0.0
    %84 = vmatpush1.xpose.msra.mxu0 0.0
    %85 = vmatprep.subr.mxu0 0.0
    %86 = vmatpush1.xpose.msra.mxu0 0.0
    %87 = vmatprep.subr.mxu0 0.0
    %88 = vmatpush1.xpose.msra.mxu0 0.0
    %89 = vmatprep.subr.mxu0 0.0
    %90 = vmatpush1.xpose.msra.mxu0 0.0
    %91 = vmatprep.subr.mxu0 0.0
    %92 = vmatpush1.xpose.msra.mxu0 0.0
    %93 = vmatprep.subr.mxu0 0.0
    %94 = vmatpush1.xpose.msra.mxu0 0.0
    %95 = vmatprep.subr.mxu0 0.0
    %96 = vmatpush1.xpose.msra.mxu0 0.0
    %97 = vmatprep.subr.mxu0 0.0
    %98 = vmatpush1.xpose.msra.mxu0 0.0
    %99 = vmatprep.subr.mxu0 0.0
    %100 = vmatpush1.xpose.msra.mxu0 0.0
    %101 = vmatprep.subr.mxu0 0.0
    %102 = vmatpush1.xpose.msra.mxu0 0.0
    %103 = vmatprep.subr.mxu0 0.0
    %104 = vmatpush1.xpose.msra.mxu0 0.0
    %105 = vmatprep.subr.mxu0 0.0
    %106 = vmatpush1.xpose.msra.mxu0 0.0
    %107 = vmatprep.subr.mxu0 0.0
    %108 = vmatpush1.xpose.msra.mxu0 0.0
    %109 = vmatprep.subr.mxu0 0.0
    %110 = vmatpush1.xpose.msra.mxu0 0.0
    %111 = vmatprep.subr.mxu0 0.0
    %112 = vmatpush1.xpose.msra.mxu0 0.0
    %113 = vmatprep.subr.mxu0 0.0
    %114 = vmatpush1.xpose.msra.mxu0 0.0
    %115 = vmatprep.mubr.f32.mxu0 0.0
    %116 = vmatmul.mubr.f32.gmra.mrb[0].mxu0 %v43
    %v117 = vpop.f32.mrb[0].mxu0
    %v118 = vadd.f32 %v39, %v117
    %v119 = vpop.f32.mrb[0].mxu0
    %120 = vdwg.mxu0
    %vm121 = vcmask 130048
    %v122 = vsel %vm121, %v118, -inf
    %v123 = vrot.slane %v122, 4
    %v124 = vmax.f32 %v122, %v123
    %v125 = vrot.slane %v124, 2
    %v126 = vmax.f32 %v124, %v125
    %v127 = vrot.slane %v126, 1
    %v128 = vmax.f32 %v126, %v127
    %v129 = vsub.f32 %v118, %v128
    %v130 = vmul.f32 %v129, 1.442695
    %v131 = vpow.pop %v130
    %v132 = vsel %vm121, %v131, 0.0
    %v133 = vrot.slane %v132, 4
    %v134 = vadd.f32 %v132, %v133
    %v135 = vrot.slane %v134, 2
    %v136 = vadd.f32 %v134, %v135
    %v137 = vrot.slane %v136, 1
    %v138 = vadd.f32 %v136, %v137
    %v139 = vrcp.pop %v138
    %vm140 = vcmask 122880
    %141 = vst.msk [vmem:[#allocation5] sm:$0x1] %vm140, %v139
    %v142 = vlaneseq
    %v143 = vshrl.u32 %v142, 7
    %vm144 = vcmp.eq.f32.partialorder %v118, %v128
    %v145 = vsel %vm144, %v143, 8
    %v146 = vsel %vm121, %v145, 2147483647
    %v147 = vrot.slane %v146, 4
    %vm148 = vcmp.lt.s32.totalorder %v146, %v147
    %v149 = vsel %vm148, %v146, %v147
    %v150 = vrot.slane %v149, 2
    %vm151 = vcmp.lt.s32.totalorder %v149, %v150
    %v152 = vsel %vm151, %v149, %v150
    %v153 = vrot.slane %v152, 1
    %vm154 = vcmp.lt.s32.totalorder %v152, %v153
    %v155 = vsel %vm154, %v152, %v153
    %156 = vst.msk [vmem:[#allocation6] sm:$0x1] %vm140, %v155
    // Predicated region
    $region18: #{tpu_custom_call.1} parent=1 // pred_check
      _
    $region19: #{tpu_custom_call.1} parent=1 // pred_check_branch
      %158 = sbr.rel (0) target = $region21
    $region20: #{tpu_custom_call.1} parent=1 // pred_region
      %s160 = ssub.s32 16, 16
      %161 = vsyncadd [#allocation4], %s160
      %s163 = sshll.u32 [#allocation5], 4
      %s164 = int_to_ptr.vmem [resolvable:$true] %s163
      %166 = dma.vmem_to_hbm [thread:$0]  %s164, 16, %s3, [#allocation4]
    $region21: #{tpu_custom_call.1} parent=1 // pred_fallthru
      _
    // Predicated region
    $region22: #{tpu_custom_call.1} parent=1 // pred_check
      _
    $region23: #{tpu_custom_call.1} parent=1 // pred_check_branch
      %168 = sbr.rel (0) target = $region25
    $region24: #{tpu_custom_call.1} parent=1 // pred_region
      %s170 = ssub.s32 16, 16
      %171 = vsyncadd [#allocation7], %s170
      %s173 = sshll.u32 [#allocation6], 4
      %s174 = int_to_ptr.vmem [resolvable:$true] %s173
      %176 = dma.vmem_to_hbm [thread:$0]  %s174, 16, %s4, [#allocation7]
    $region25: #{tpu_custom_call.1} parent=1 // pred_fallthru
      _
    // Predicated region
    $region26: #{tpu_custom_call.1} parent=1 // pred_check
      _
    $region27: #{tpu_custom_call.1} parent=1 // pred_check_branch
      %178 = sbr.rel (0) target = $region29
    $region28: #{tpu_custom_call.1} parent=1 // pred_region
      %179 = dma.done [#allocation4], 16
    $region29: #{tpu_custom_call.1} parent=1 // pred_fallthru
      _
    // Predicated region
    $region30: #{tpu_custom_call.1} parent=1 // pred_check
      _
    $region31: #{tpu_custom_call.1} parent=1 // pred_check_branch
      %181 = sbr.rel (0) target = $region33
    $region32: #{tpu_custom_call.1} parent=1 // pred_region
      %182 = dma.done [#allocation7], 16
    $region33: #{tpu_custom_call.1} parent=1 // pred_fallthru
      _
    %183 = vsyncpa [#allocation3], 1
    %184 = vsyncpa [#allocation4], 1
    %185 = vsyncpa [#allocation7], 1

// kernel: tpu_custom_call.1
$region0: #{tpu_custom_call.1}
  #allocation0 [shape = 'u32[]', space=smem, size = 0x4, offset = 0x4, fixed_abs, tag = 'smem constant byte address 0x4 - core index']
  #allocation1 [shape = 'u32[144,128]{1,0:T(1,128)}', space=vmem, size = 0x12000, scoped, tag = 'internal scratch']
  %s0 = inlined_call_operand.hbm [shape: f32[16,32], index: 0, kind: input, shape index: {}]
  %s1 = inlined_call_operand.vmem [shape: f32[8,32], index: 1, kind: input, shape index: {}]
  %s2 = inlined_call_operand.vmem [shape: f32[8,1], index: 2, kind: input, shape index: {}]
  %s3 = inlined_call_operand.hbm [shape: f32[1,1,16], index: 3, kind: output, shape index: {0}]
  %s4 = inlined_call_operand.hbm [shape: s32[1,1,16], index: 4, kind: output, shape index: {1}]
  %5 = xla_tuple %s3, %s4
  %s6 = sld [smem:[#allocation0]]
  $region34: #{tpu_custom_call.1} parent=0
    _
  %s8 = ssub.s32 1, %s6
  %s9 = scalar_select 0, %s8, %s6
  $region1: #{tpu_custom_call.1} parent=0
    #allocation2 [shape = 'u8[8192]{0}', space=vmem, size = 0x2000, scoped, tag = 'input window, operand 0, single buffered']
    #allocation3 [shape = 's32[1]{0}', space=sflag, size = 0x4, scoped, tag = 'scoped memory for tpu_custom_call.1']
    #allocation4 [shape = 's32[1]{0}', space=sflag, size = 0x4, scoped, tag = 'scoped memory for tpu_custom_call.1']
    #allocation5 [shape = 'u8[512]{0}', space=vmem, size = 0x400, scoped, tag = 'output window, operand 0, single buffered']
    #allocation6 [shape = 'u8[512]{0}', space=vmem, size = 0x400, scoped, tag = 'output window, operand 1, single buffered']
    #allocation7 [shape = 's32[1]{0}', space=sflag, size = 0x4, scoped, tag = 'scoped memory for tpu_custom_call.1']
    %10 = vsyncpa [#allocation3], 0
    %11 = vsyncpa [#allocation4], 0
    %12 = vsyncpa [#allocation7], 0
    // Predicated region
    $region2: #{tpu_custom_call.1} parent=1 // pred_check
      _
    $region3: #{tpu_custom_call.1} parent=1 // pred_check_branch
      %14 = sbr.rel (0) target = $region5
    $region4: #{tpu_custom_call.1} parent=1 // pred_region
      %s16 = ssub.s32 256, 256
      %17 = vsyncadd [#allocation3], %s16
      %s18 = sshll.u32 [#allocation2], 4
      %s19 = int_to_ptr.vmem [resolvable:$true] %s18
      %24 = dma.hbm_to_vmem [thread:$0]  %s0, 256, %s19, [#allocation3], 128, 128, 8
    $region5: #{tpu_custom_call.1} parent=1 // pred_fallthru
      _
    // Predicated region
    $region6: #{tpu_custom_call.1} parent=1 // pred_check
      _
    $region7: #{tpu_custom_call.1} parent=1 // pred_check_branch
      %26 = sbr.rel (0) target = $region9
    $region8: #{tpu_custom_call.1} parent=1 // pred_region
      _
    $region9: #{tpu_custom_call.1} parent=1 // pred_fallthru
      _
    // Predicated region
    $region10: #{tpu_custom_call.1} parent=1 // pred_check
      _
    $region11: #{tpu_custom_call.1} parent=1 // pred_check_branch
      %28 = sbr.rel (0) target = $region13
    $region12: #{tpu_custom_call.1} parent=1 // pred_region
      _
    $region13: #{tpu_custom_call.1} parent=1 // pred_fallthru
      _
    // Predicated region
    $region14: #{tpu_custom_call.1} parent=1 // pred_check
      _
    $region15: #{tpu_custom_call.1} parent=1 // pred_check_branch
      %30 = sbr.rel (0) target = $region17
    $region16: #{tpu_custom_call.1} parent=1 // pred_region
      %31 = dma.done [#allocation3], 256
    $region17: #{tpu_custom_call.1} parent=1 // pred_fallthru
      _
    %v32 = vld [vmem:[%s1] sm:$0xff]
    %v33 = vld [vmem:[#allocation2] sm:$0xff]
    %v34 = vld [vmem:[#allocation2 + $0x8] sm:$0xff]
    %v35 = vld [vmem:[%s2] sm:$0xff]
    %37 = vset.pattern.permute.xlu0 0
    %38 = vperm.xlu0 %37, %v35
    %v39 = vpop.permute.xlu0 %38
    %vm41 = vcmask 261120
    %v43 = vsel %vm41, %v32, 0
    %v46 = vsel %vm41, %v33, 0
    %v49 = vsel %vm41, %v34, 0
    %51 = vmatprep.subr.mxu0 0.0
    %52 = vmatpush1.xpose.msra.mxu0 %v46
    %53 = vmatprep.subr.mxu0 0.0
    %54 = vmatpush1.xpose.msra.mxu0 %v49
    %55 = vmatprep.subr.mxu0 0.0
    %56 = vmatpush1.xpose.msra.mxu0 0.0
    %57 = vmatprep.subr.mxu0 0.0
    %58 = vmatpush1.xpose.msra.mxu0 0.0
    %59 = vmatprep.subr.mxu0 0.0
    %60 = vmatpush1.xpose.msra.mxu0 0.0
    %61 = vmatprep.subr.mxu0 0.0
    %62 = vmatpush1.xpose.msra.mxu0 0.0
    %63 = vmatprep.subr.mxu0 0.0
    %64 = vmatpush1.xpose.msra.mxu0 0.0
    %65 = vmatprep.subr.mxu0 0.0
    %66 = vmatpush1.xpose.msra.mxu0 0.0
    %67 = vmatprep.subr.mxu0 0.0
    %68 = vmatpush1.xpose.msra.mxu0 0.0
    %69 = vmatprep.subr.mxu0 0.0
    %70 = vmatpush1.xpose.msra.mxu0 0.0
    %71 = vmatprep.subr.mxu0 0.0
    %72 = vmatpush1.xpose.msra.mxu0 0.0
    %73 = vmatprep.subr.mxu0 0.0
    %74 = vmatpush1.xpose.msra.mxu0 0.0
    %75 = vmatprep.subr.mxu0 0.0
    %76 = vmatpush1.xpose.msra.mxu0 0.0
    %77 = vmatprep.subr.mxu0 0.0
    %78 = vmatpush1.xpose.msra.mxu0 0.0
    %79 = vmatprep.subr.mxu0 0.0
    %80 = vmatpush1.xpose.msra.mxu0 0.0
    %81 = vmatprep.subr.mxu0 0.0
    %82 = vmatpush1.xpose.msra.mxu0 0.0
    %83 = vmatprep.subr.mxu0 0.0
    %84 = vmatpush1.xpose.msra.mxu0 0.0
    %85 = vmatprep.subr.mxu0 0.0
    %86 = vmatpush1.xpose.msra.mxu0 0.0
    %87 = vmatprep.subr.mxu0 0.0
    %88 = vmatpush1.xpose.msra.mxu0 0.0
    %89 = vmatprep.subr.mxu0 0.0
    %90 = vmatpush1.xpose.msra.mxu0 0.0
    %91 = vmatprep.subr.mxu0 0.0
    %92 = vmatpush1.xpose.msra.mxu0 0.0
    %93 = vmatprep.subr.mxu0 0.0
    %94 = vmatpush1.xpose.msra.mxu0 0.0
    %95 = vmatprep.subr.mxu0 0.0
    %96 = vmatpush1.xpose.msra.mxu0 0.0
    %97 = vmatprep.subr.mxu0 0.0
    %98 = vmatpush1.xpose.msra.mxu0 0.0
    %99 = vmatprep.subr.mxu0 0.0
    %100 = vmatpush1.xpose.msra.mxu0 0.0
    %101 = vmatprep.subr.mxu0 0.0
    %102 = vmatpush1.xpose.msra.mxu0 0.0
    %103 = vmatprep.subr.mxu0 0.0
    %104 = vmatpush1.xpose.msra.mxu0 0.0
    %105 = vmatprep.subr.mxu0 0.0
    %106 = vmatpush1.xpose.msra.mxu0 0.0
    %107 = vmatprep.subr.mxu0 0.0
    %108 = vmatpush1.xpose.msra.mxu0 0.0
    %109 = vmatprep.subr.mxu0 0.0
    %110 = vmatpush1.xpose.msra.mxu0 0.0
    %111 = vmatprep.subr.mxu0 0.0
    %112 = vmatpush1.xpose.msra.mxu0 0.0
    %113 = vmatprep.subr.mxu0 0.0
    %114 = vmatpush1.xpose.msra.mxu0 0.0
    %115 = vmatprep.mubr.f32.mxu0 0.0
    %116 = vmatmul.mubr.f32.gmra.mrb[0].mxu0 %v43
    %v117 = vpop.f32.mrb[0].mxu0
    %v118 = vadd.f32 %v39, %v117
    %v119 = vpop.f32.mrb[0].mxu0
    %120 = vdwg.mxu0
    %vm121 = vcmask 130048
    %v122 = vsel %vm121, %v118, -inf
    %v123 = vrot.slane %v122, 4
    %v124 = vmax.f32 %v122, %v123
    %v125 = vrot.slane %v124, 2
    %v126 = vmax.f32 %v124, %v125
    %v127 = vrot.slane %v126, 1
    %v128 = vmax.f32 %v126, %v127
    %v129 = vsub.f32 %v118, %v128
    %v130 = vmul.f32 %v129, 1.442695
    %v131 = vpow.pop %v130
    %v132 = vsel %vm121, %v131, 0.0
    %v133 = vrot.slane %v132, 4
    %v134 = vadd.f32 %v132, %v133
    %v135 = vrot.slane %v134, 2
    %v136 = vadd.f32 %v134, %v135
    %v137 = vrot.slane %v136, 1
    %v138 = vadd.f32 %v136, %v137
    %v139 = vrcp.pop %v138
    %vm140 = vcmask 122880
    %141 = vst.msk [vmem:[#allocation5] sm:$0x1] %vm140, %v139
    %v142 = vlaneseq
    %v143 = vshrl.u32 %v142, 7
    %vm144 = vcmp.eq.f32.partialorder %v118, %v128
    %v145 = vsel %vm144, %v143, 8
    %v146 = vsel %vm121, %v145, 2147483647
    %v147 = vrot.slane %v146, 4
    %vm148 = vcmp.lt.s32.totalorder %v146, %v147
    %v149 = vsel %vm148, %v146, %v147
    %v150 = vrot.slane %v149, 2
    %vm151 = vcmp.lt.s32.totalorder %v149, %v150
    %v152 = vsel %vm151, %v149, %v150
    %v153 = vrot.slane %v152, 1
    %vm154 = vcmp.lt.s32.totalorder %v152, %v153
    %v155 = vsel %vm154, %v152, %v153
    %156 = vst.msk [vmem:[#allocation6] sm:$0x1] %vm140, %v155
    // Predicated region
    $region18: #{tpu_custom_call.1} parent=1 // pred_check
      _
    $region19: #{tpu_custom_call.1} parent=1 // pred_check_branch
      %158 = sbr.rel (0) target = $region21
    $region20: #{tpu_custom_call.1} parent=1 // pred_region
      %s160 = ssub.s32 16, 16
      %161 = vsyncadd [#allocation4], %s160
      %s163 = sshll.u32 [#allocation5], 4
      %s164 = int_to_ptr.vmem [resolvable:$true] %s163
      %166 = dma.vmem_to_hbm [thread:$0]  %s164, 16, %s3, [#allocation4]
    $region21: #{tpu_custom_call.1} parent=1 // pred_fallthru
      _
    // Predicated region
    $region22: #{tpu_custom_call.1} parent=1 // pred_check
      _
    $region23: #{tpu_custom_call.1} parent=1 // pred_check_branch
      %168 = sbr.rel (0) target = $region25
    $region24: #{tpu_custom_call.1} parent=1 // pred_region
      %s170 = ssub.s32 16, 16
      %171 = vsyncadd [#allocation7], %s170
      %s173 = sshll.u32 [#allocation6], 4
      %s174 = int_to_ptr.vmem [resolvable:$true] %s173
      %176 = dma.vmem_to_hbm [thread:$0]  %s174, 16, %s4, [#allocation7]
    $region25: #{tpu_custom_call.1} parent=1 // pred_fallthru
      _
    // Predicated region
    $region26: #{tpu_custom_call.1} parent=1 // pred_check
      _
    $region27: #{tpu_custom_call.1} parent=1 // pred_check_branch
      %178 = sbr.rel (0) target = $region29
    $region28: #{tpu_custom_call.1} parent=1 // pred_region
      %179 = dma.done [#allocation4], 16
    $region29: #{tpu_custom_call.1} parent=1 // pred_fallthru
      _
    // Predicated region
    $region30: #{tpu_custom_call.1} parent=1 // pred_check
      _
    $region31: #{tpu_custom_call.1} parent=1 // pred_check_branch
      %181 = sbr.rel (0) target = $region33
    $region32: #{tpu_custom_call.1} parent=1 // pred_region
      %182 = dma.done [#allocation7], 16
    $region33: #{tpu_custom_call.1} parent=1 // pred_fallthru
      _
    %183 = vsyncpa [#allocation3], 1
    %184 = vsyncpa [#allocation4], 1
    %185 = vsyncpa [#allocation7], 1

</llo_original>
